<compile_context>
chip_gen: v7x
topology: tpu7x:2x2x1
jax: 0.10.0
libtpu: 0.0.40
codegen_flags: <defaults>
</compile_context>

<pallas_src>
import jax
import jax.numpy as jnp
from jax.experimental import pallas as pl
from jax.experimental.pallas import tpu as pltpu

INPUT_SIZE = 1068
HIDDEN_SIZES = [165, 67, 46, 53]
DROPOUT_RATE = 0.12976380378708768  # unused at inference

LANE = 128
SUBLANE = 8
PADDED_INPUT = 1152                 # next multiple of 128 above 1068
DEFAULT_TILE_BATCH = 1024           # bf16 (1024, 1152) tile = ~2.4 MiB; x2 bufs
                                    # + ~0.4 MiB weights fits v5e's 16 MiB scoped
                                    # VMEM and v7x's 32 MiB scoped default.


def _round_up(x, m):
    return (x + m - 1) // m * m


def _mlp_kernel(x_ref,
                w1_ref, b1_ref,
                w2_ref, b2_ref,
                w3_ref, b3_ref,
                w4_ref, b4_ref,
                w5_ref, b5_ref,
                o_ref):
    # bf16 operands on the MXU, f32 accumulation; elementwise work in f32.
    h = jnp.dot(x_ref[...], w1_ref[...],
                preferred_element_type=jnp.float32) + b1_ref[...]
    h = jnp.maximum(h, 0.0)                              # relu(fc1) (dropout = id)

    h = jnp.dot(h.astype(jnp.bfloat16), w2_ref[...],
                preferred_element_type=jnp.float32) + b2_ref[...]
    h = jnp.maximum(h, 0.0)                              # relu(fc2)

    h = jnp.dot(h.astype(jnp.bfloat16), w3_ref[...],
                preferred_element_type=jnp.float32) + b3_ref[...]
    h = jnp.maximum(h, 0.0)                              # relu(fc3)

    h = jnp.dot(h.astype(jnp.bfloat16), w4_ref[...],
                preferred_element_type=jnp.float32) + b4_ref[...]
    h = jnp.maximum(h, 0.0)                              # relu(fc4)

    # fc5: (53 -> 1). N=1 matmul wastes the MXU; do multiply + lane reduce on
    # the VPU/XLU instead. w5 is passed pre-transposed as (1, 53).
    logits = jnp.sum(h * w5_ref[...].astype(jnp.float32),
                     axis=-1, keepdims=True) + b5_ref[...]
    o_ref[...] = jax.nn.sigmoid(logits)                  # sigmoid(fc5)


def dajare_predictor(x, params, *, tile_batch=DEFAULT_TILE_BATCH):
    """x: (B, INPUT_SIZE) float32 -> (B, 1) float32."""
    batch = x.shape[0]
    (w1, b1), (w2, b2), (w3, b3), (w4, b4), (w5, b5) = params

    # Batch tiling: TB multiple of 8, batch padded up to a multiple of TB.
    tb = min(tile_batch, _round_up(batch, SUBLANE))
    padded_batch = _round_up(batch, tb)
    grid = (padded_batch // tb,)

    # bf16 operands + zero feature-padding 1068 -> 1152 (zero cols of x and
    # zero rows of w1 contribute exactly 0 to the fc1 accumulation).
    x_p = jnp.zeros((padded_batch, PADDED_INPUT), jnp.bfloat16)
    x_p = x_p.at[:batch, :INPUT_SIZE].set(x.astype(jnp.bfloat16))
    w1_p = jnp.zeros((PADDED_INPUT, HIDDEN_SIZES[0]), jnp.bfloat16)
    w1_p = w1_p.at[:INPUT_SIZE, :].set(w1.astype(jnp.bfloat16))

    w2b = w2.astype(jnp.bfloat16)
    w3b = w3.astype(jnp.bfloat16)
    w4b = w4.astype(jnp.bfloat16)
    w5_row = w5.reshape(1, HIDDEN_SIZES[3]).astype(jnp.bfloat16)   # (53,1)->(1,53)
    b1f, b2f, b3f, b4f, b5f = (b.astype(jnp.float32)
                               for b in (b1, b2, b3, b4, b5))

    def pinned(shape):
        # Full-array block, same block index every grid step -> stays resident.
        return pl.BlockSpec(shape, lambda i: (0, 0))

    in_specs = [
        pl.BlockSpec((tb, PADDED_INPUT), lambda i: (i, 0)),        # x tile
        pinned(w1_p.shape), pinned(b1f.shape),
        pinned(w2b.shape), pinned(b2f.shape),
        pinned(w3b.shape), pinned(b3f.shape),
        pinned(w4b.shape), pinned(b4f.shape),
        pinned(w5_row.shape), pinned(b5f.shape),
    ]
    out_specs = pl.BlockSpec((tb, 1), lambda i: (i, 0))

    flops_per_row = 2 * (PADDED_INPUT * HIDDEN_SIZES[0]
                         + HIDDEN_SIZES[0] * HIDDEN_SIZES[1]
                         + HIDDEN_SIZES[1] * HIDDEN_SIZES[2]
                         + HIDDEN_SIZES[2] * HIDDEN_SIZES[3]
                         + HIDDEN_SIZES[3] * 1)
    weight_bytes = sum(int(a.size) * a.dtype.itemsize
                       for a in (w1_p, b1f, w2b, b2f, w3b, b3f,
                                 w4b, b4f, w5_row, b5f))
    cost = pl.CostEstimate(
        flops=flops_per_row * padded_batch,
        transcendentals=padded_batch,                      # sigmoid exp
        bytes_accessed=int(x_p.size) * 2 + weight_bytes + padded_batch * 4,
    )

    out = pl.pallas_call(
        _mlp_kernel,
        out_shape=jax.ShapeDtypeStruct((padded_batch, 1), jnp.float32),
        grid=grid,
        in_specs=in_specs,
        out_specs=out_specs,
        compiler_params=pltpu.CompilerParams(
            dimension_semantics=("parallel",)),            # megacore on v7x
        cost_estimate=cost,
    )(x_p, w1_p, b1f, w2b, b2f, w3b, b3f, w4b, b4f, w5_row, b5f)

    return out[:batch]


def init_params(key):
    """Deterministic PyTorch-Linear-style init: U(-1/sqrt(fan_in), 1/sqrt(fan_in))."""
    dims = [INPUT_SIZE] + HIDDEN_SIZES + [1]
    params = []
    for i in range(len(dims) - 1):
        fan_in, fan_out = dims[i], dims[i + 1]
        key, kw, kb = jax.random.split(key, 3)
        bound = 1.0 / jnp.sqrt(float(fan_in))
        w = jax.random.uniform(kw, (fan_in, fan_out), jnp.float32, -bound, bound)
        b = jax.random.uniform(kb, (1, fan_out), jnp.float32, -bound, bound)
        params.append((w, b))
    return params


def reference_forward(x, params, matmul_dtype=jnp.float32):
    """Pure-JAX reference. matmul_dtype=bfloat16 mirrors the kernel's precision."""
    h = x
    for i, (w, b) in enumerate(params):
        h = jnp.dot(h.astype(matmul_dtype), w.astype(matmul_dtype),
                    preferred_element_type=jnp.float32) + b.astype(jnp.float32)
        if i < len(params) - 1:
            h = jnp.maximum(h, 0.0)
    return jax.nn.sigmoid(h)


if __name__ == "__main__":
    key = jax.random.PRNGKey(0)
    key, kx = jax.random.split(key)

    batch = 8
    x = jax.random.normal(kx, (batch, INPUT_SIZE), dtype=jnp.float32)
    params = init_params(key)

    out = jax.block_until_ready(dajare_predictor(x, params))
    assert out.shape == (batch, 1), out.shape

    # Precision-matched reference (bf16 operands, f32 accumulation): tight check.
    ref_bf16 = reference_forward(x, params, matmul_dtype=jnp.bfloat16)
    assert jnp.allclose(out, ref_bf16, atol=2e-3, rtol=2e-3), (out, ref_bf16)

    # Full-f32 reference: loose sanity check (bf16 operand quantization).
    ref_f32 = reference_forward(x, params, matmul_dtype=jnp.float32)
    assert float(jnp.max(jnp.abs(out - ref_f32))) < 5e-2, (out, ref_f32)

    print("KERNEL_OK")
</pallas_src>

<mosaic_0001>
module attributes {stable_mosaic.version = 11 : i64} {
  func.func @_mlp_kernel(%arg0: i32, %arg1: memref<8x1152xbf16, #tpu.memory_space<vmem>>, %arg2: memref<1152x165xbf16, #tpu.memory_space<vmem>>, %arg3: memref<1x165xf32, #tpu.memory_space<vmem>>, %arg4: memref<165x67xbf16, #tpu.memory_space<vmem>>, %arg5: memref<1x67xf32, #tpu.memory_space<vmem>>, %arg6: memref<67x46xbf16, #tpu.memory_space<vmem>>, %arg7: memref<1x46xf32, #tpu.memory_space<vmem>>, %arg8: memref<46x53xbf16, #tpu.memory_space<vmem>>, %arg9: memref<1x53xf32, #tpu.memory_space<vmem>>, %arg10: memref<1x53xbf16, #tpu.memory_space<vmem>>, %arg11: memref<1x1xf32, #tpu.memory_space<vmem>>, %arg12: memref<8x1xf32, #tpu.memory_space<vmem>>) attributes {dimension_semantics = [#tpu.dimension_semantics<parallel>], iteration_bounds = array<i64: 1>, scalar_prefetch = 0 : i64, scratch_operands = 0 : i64, tpu.core_type = #tpu.core_type<tc>, window_params = [{transform_indices = @transform_0, window_bounds = array<i64: 8, 1152>}, {pipeline_mode = #tpu.pipeline_mode<synchronous>, transform_indices = @transform_1, window_bounds = array<i64: 1152, 165>}, {pipeline_mode = #tpu.pipeline_mode<synchronous>, transform_indices = @transform_2, window_bounds = array<i64: 1, 165>}, {pipeline_mode = #tpu.pipeline_mode<synchronous>, transform_indices = @transform_3, window_bounds = array<i64: 165, 67>}, {pipeline_mode = #tpu.pipeline_mode<synchronous>, transform_indices = @transform_4, window_bounds = array<i64: 1, 67>}, {pipeline_mode = #tpu.pipeline_mode<synchronous>, transform_indices = @transform_5, window_bounds = array<i64: 67, 46>}, {pipeline_mode = #tpu.pipeline_mode<synchronous>, transform_indices = @transform_6, window_bounds = array<i64: 1, 46>}, {pipeline_mode = #tpu.pipeline_mode<synchronous>, transform_indices = @transform_7, window_bounds = array<i64: 46, 53>}, {pipeline_mode = #tpu.pipeline_mode<synchronous>, transform_indices = @transform_8, window_bounds = array<i64: 1, 53>}, {pipeline_mode = #tpu.pipeline_mode<synchronous>, transform_indices = @transform_9, window_bounds = array<i64: 1, 53>}, {pipeline_mode = #tpu.pipeline_mode<synchronous>, transform_indices = @transform_10, window_bounds = array<i64: 1, 1>}, {transform_indices = @transform_11, window_bounds = array<i64: 8, 1>}]} {
    %c0 = arith.constant 0 : index
    %c0_0 = arith.constant 0 : index
    %0 = vector.load %arg1[%c0, %c0_0] : memref<8x1152xbf16, #tpu.memory_space<vmem>>, vector<8x1152xbf16>
    %c0_1 = arith.constant 0 : index
    %c0_2 = arith.constant 0 : index
    %1 = vector.load %arg2[%c0_1, %c0_2] : memref<1152x165xbf16, #tpu.memory_space<vmem>>, vector<1152x165xbf16>
    %cst = arith.constant dense<0.000000e+00> : vector<8x165xf32>
    %2 = tpu.matmul %0, %1, %cst {dimension_numbers = #tpu.dot_dimension_numbers<[1], [0], [0], [1], [0, 0, 1, 1], [], []>} : vector<8x1152xbf16>, vector<1152x165xbf16>, vector<8x165xf32> -> vector<8x165xf32>
    %c0_3 = arith.constant 0 : index
    %c0_4 = arith.constant 0 : index
    %3 = vector.load %arg3[%c0_3, %c0_4] : memref<1x165xf32, #tpu.memory_space<vmem>>, vector<1x165xf32>
    %4 = vector.broadcast %3 : vector<1x165xf32> to vector<8x165xf32>
    %5 = arith.addf %2, %4 : vector<8x165xf32>
    %cst_5 = arith.constant 0.000000e+00 : f32
    %6 = vector.broadcast %cst_5 : f32 to vector<8x165xf32>
    %7 = arith.maximumf %5, %6 : vector<8x165xf32>
    %8 = arith.truncf %7 : vector<8x165xf32> to vector<8x165xbf16>
    %c0_6 = arith.constant 0 : index
    %c0_7 = arith.constant 0 : index
    %9 = vector.load %arg4[%c0_6, %c0_7] : memref<165x67xbf16, #tpu.memory_space<vmem>>, vector<165x67xbf16>
    %cst_8 = arith.constant dense<0.000000e+00> : vector<8x67xf32>
    %10 = tpu.matmul %8, %9, %cst_8 {dimension_numbers = #tpu.dot_dimension_numbers<[1], [0], [0], [1], [0, 0, 1, 1], [], []>} : vector<8x165xbf16>, vector<165x67xbf16>, vector<8x67xf32> -> vector<8x67xf32>
    %c0_9 = arith.constant 0 : index
    %c0_10 = arith.constant 0 : index
    %11 = vector.load %arg5[%c0_9, %c0_10] : memref<1x67xf32, #tpu.memory_space<vmem>>, vector<1x67xf32>
    %12 = vector.broadcast %11 : vector<1x67xf32> to vector<8x67xf32>
    %13 = arith.addf %10, %12 : vector<8x67xf32>
    %cst_11 = arith.constant 0.000000e+00 : f32
    %14 = vector.broadcast %cst_11 : f32 to vector<8x67xf32>
    %15 = arith.maximumf %13, %14 : vector<8x67xf32>
    %16 = arith.truncf %15 : vector<8x67xf32> to vector<8x67xbf16>
    %c0_12 = arith.constant 0 : index
    %c0_13 = arith.constant 0 : index
    %17 = vector.load %arg6[%c0_12, %c0_13] : memref<67x46xbf16, #tpu.memory_space<vmem>>, vector<67x46xbf16>
    %cst_14 = arith.constant dense<0.000000e+00> : vector<8x46xf32>
    %18 = tpu.matmul %16, %17, %cst_14 {dimension_numbers = #tpu.dot_dimension_numbers<[1], [0], [0], [1], [0, 0, 1, 1], [], []>} : vector<8x67xbf16>, vector<67x46xbf16>, vector<8x46xf32> -> vector<8x46xf32>
    %c0_15 = arith.constant 0 : index
    %c0_16 = arith.constant 0 : index
    %19 = vector.load %arg7[%c0_15, %c0_16] : memref<1x46xf32, #tpu.memory_space<vmem>>, vector<1x46xf32>
    %20 = vector.broadcast %19 : vector<1x46xf32> to vector<8x46xf32>
    %21 = arith.addf %18, %20 : vector<8x46xf32>
    %cst_17 = arith.constant 0.000000e+00 : f32
    %22 = vector.broadcast %cst_17 : f32 to vector<8x46xf32>
    %23 = arith.maximumf %21, %22 : vector<8x46xf32>
    %24 = arith.truncf %23 : vector<8x46xf32> to vector<8x46xbf16>
    %c0_18 = arith.constant 0 : index
    %c0_19 = arith.constant 0 : index
    %25 = vector.load %arg8[%c0_18, %c0_19] : memref<46x53xbf16, #tpu.memory_space<vmem>>, vector<46x53xbf16>
    %cst_20 = arith.constant dense<0.000000e+00> : vector<8x53xf32>
    %26 = tpu.matmul %24, %25, %cst_20 {dimension_numbers = #tpu.dot_dimension_numbers<[1], [0], [0], [1], [0, 0, 1, 1], [], []>} : vector<8x46xbf16>, vector<46x53xbf16>, vector<8x53xf32> -> vector<8x53xf32>
    %c0_21 = arith.constant 0 : index
    %c0_22 = arith.constant 0 : index
    %27 = vector.load %arg9[%c0_21, %c0_22] : memref<1x53xf32, #tpu.memory_space<vmem>>, vector<1x53xf32>
    %28 = vector.broadcast %27 : vector<1x53xf32> to vector<8x53xf32>
    %29 = arith.addf %26, %28 : vector<8x53xf32>
    %cst_23 = arith.constant 0.000000e+00 : f32
    %30 = vector.broadcast %cst_23 : f32 to vector<8x53xf32>
    %31 = arith.maximumf %29, %30 : vector<8x53xf32>
    %c0_24 = arith.constant 0 : index
    %c0_25 = arith.constant 0 : index
    %32 = vector.load %arg10[%c0_24, %c0_25] : memref<1x53xbf16, #tpu.memory_space<vmem>>, vector<1x53xbf16>
    %33 = arith.extf %32 : vector<1x53xbf16> to vector<1x53xf32>
    %34 = vector.broadcast %33 : vector<1x53xf32> to vector<8x53xf32>
    %35 = arith.mulf %31, %34 : vector<8x53xf32>
    %cst_26 = arith.constant dense<0.000000e+00> : vector<8xf32>
    %36 = vector.multi_reduction <add>, %35, %cst_26 [1] : vector<8x53xf32> to vector<8xf32>
    %37 = vector.shape_cast %36 : vector<8xf32> to vector<8x1xf32>
    %c0_27 = arith.constant 0 : index
    %c0_28 = arith.constant 0 : index
    %38 = vector.load %arg11[%c0_27, %c0_28] : memref<1x1xf32, #tpu.memory_space<vmem>>, vector<1x1xf32>
    %39 = vector.broadcast %38 : vector<1x1xf32> to vector<8x1xf32>
    %40 = arith.addf %37, %39 : vector<8x1xf32>
    %41 = arith.negf %40 : vector<8x1xf32>
    %42 = math.exp %41 : vector<8x1xf32>
    %cst_29 = arith.constant 1.000000e+00 : f32
    %43 = vector.broadcast %cst_29 : f32 to vector<8x1xf32>
    %44 = arith.addf %43, %42 : vector<8x1xf32>
    %45 = arith.divf %43, %44 : vector<8x1xf32>
    %c0_30 = arith.constant 0 : index
    %c0_31 = arith.constant 0 : index
    %46 = vector.load %arg12[%c0_30, %c0_31] : memref<8x1xf32, #tpu.memory_space<vmem>>, vector<8x1xf32>
    tpu.vector_store %arg12[%c0_30, %c0_31], %45 {strides = array<i32>} : memref<8x1xf32, #tpu.memory_space<vmem>>, vector<8x1xf32>,
    return
  }
  func.func @transform_0(%arg0: i32) -> (i32, i32) {
    %c0_i32 = arith.constant 0 : i32
    %c0_i32_0 = arith.constant 0 : i32
    return %arg0, %c0_i32 : i32, i32
  }
  func.func @transform_1(%arg0: i32) -> (i32, i32) {
    %c0_i32 = arith.constant 0 : i32
    %c0_i32_0 = arith.constant 0 : i32
    %c0_i32_1 = arith.constant 0 : i32
    return %c0_i32, %c0_i32_0 : i32, i32
  }
  func.func @transform_2(%arg0: i32) -> (i32, i32) {
    %c0_i32 = arith.constant 0 : i32
    %c0_i32_0 = arith.constant 0 : i32
    %c0_i32_1 = arith.constant 0 : i32
    return %c0_i32, %c0_i32_0 : i32, i32
  }
  func.func @transform_3(%arg0: i32) -> (i32, i32) {
    %c0_i32 = arith.constant 0 : i32
    %c0_i32_0 = arith.constant 0 : i32
    %c0_i32_1 = arith.constant 0 : i32
    return %c0_i32, %c0_i32_0 : i32, i32
  }
  func.func @transform_4(%arg0: i32) -> (i32, i32) {
    %c0_i32 = arith.constant 0 : i32
    %c0_i32_0 = arith.constant 0 : i32
    %c0_i32_1 = arith.constant 0 : i32
    return %c0_i32, %c0_i32_0 : i32, i32
  }
  func.func @transform_5(%arg0: i32) -> (i32, i32) {
    %c0_i32 = arith.constant 0 : i32
    %c0_i32_0 = arith.constant 0 : i32
    %c0_i32_1 = arith.constant 0 : i32
    return %c0_i32, %c0_i32_0 : i32, i32
  }
  func.func @transform_6(%arg0: i32) -> (i32, i32) {
    %c0_i32 = arith.constant 0 : i32
    %c0_i32_0 = arith.constant 0 : i32
    %c0_i32_1 = arith.constant 0 : i32
    return %c0_i32, %c0_i32_0 : i32, i32
  }
  func.func @transform_7(%arg0: i32) -> (i32, i32) {
    %c0_i32 = arith.constant 0 : i32
    %c0_i32_0 = arith.constant 0 : i32
    %c0_i32_1 = arith.constant 0 : i32
    return %c0_i32, %c0_i32_0 : i32, i32
  }
  func.func @transform_8(%arg0: i32) -> (i32, i32) {
    %c0_i32 = arith.constant 0 : i32
    %c0_i32_0 = arith.constant 0 : i32
    %c0_i32_1 = arith.constant 0 : i32
    return %c0_i32, %c0_i32_0 : i32, i32
  }
  func.func @transform_9(%arg0: i32) -> (i32, i32) {
    %c0_i32 = arith.constant 0 : i32
    %c0_i32_0 = arith.constant 0 : i32
    %c0_i32_1 = arith.constant 0 : i32
    return %c0_i32, %c0_i32_0 : i32, i32
  }
  func.func @transform_10(%arg0: i32) -> (i32, i32) {
    %c0_i32 = arith.constant 0 : i32
    %c0_i32_0 = arith.constant 0 : i32
    %c0_i32_1 = arith.constant 0 : i32
    return %c0_i32, %c0_i32_0 : i32, i32
  }
  func.func @transform_11(%arg0: i32) -> (i32, i32) {
    %c0_i32 = arith.constant 0 : i32
    %c0_i32_0 = arith.constant 0 : i32
    return %arg0, %c0_i32 : i32, i32
  }
}

</mosaic_0001>

<llo_original>
// kernel: tpu_custom_call.1
$region0: #{tpu_custom_call.1}
  #allocation0 [shape = 'u32[]', space=smem, size = 0x4, offset = 0x4, fixed_abs, tag = 'smem constant byte address 0x4 - core index']
  #allocation1 [shape = 'u32[144,128]{1,0:T(1,128)}', space=vmem, size = 0x12000, scoped, tag = 'internal scratch']
  #allocation2 [shape = 'f32[1,1]{1,0:T(1,128)S(1)}', space=vmem, size = 0x200, scoped, tag = 'scoped memory for tpu_custom_call.1']
  %s0 = inlined_call_operand.vmem [shape: bf16[8,1152], index: 0, kind: input, shape index: {}]
  %s1 = inlined_call_operand.vmem [shape: bf16[1152,165], index: 1, kind: input, shape index: {}]
  %s2 = inlined_call_operand.vmem [shape: f32[1,165], index: 2, kind: input, shape index: {}]
  %s3 = inlined_call_operand.vmem [shape: bf16[165,67], index: 3, kind: input, shape index: {}]
  %s4 = inlined_call_operand.vmem [shape: f32[1,67], index: 4, kind: input, shape index: {}]
  %s5 = inlined_call_operand.vmem [shape: bf16[67,46], index: 5, kind: input, shape index: {}]
  %s6 = inlined_call_operand.vmem [shape: f32[1,46], index: 6, kind: input, shape index: {}]
  %s7 = inlined_call_operand.vmem [shape: bf16[46,53], index: 7, kind: input, shape index: {}]
  %s8 = inlined_call_operand.vmem [shape: f32[1,53], index: 8, kind: input, shape index: {}]
  %s9 = inlined_call_operand.vmem [shape: bf16[1,53], index: 9, kind: input, shape index: {}]
  %s10 = inlined_call_operand.<no memory space> [shape: f32[1,1], index: 10, kind: input, shape index: {}]
  %s11 = inlined_call_operand.vmem [shape: f32[8,1], index: 11, kind: output, shape index: {}]
  %s12 = sld [smem:[#allocation0]]
  $region54: #{tpu_custom_call.1} parent=0
    _
  %s14 = ssub.s32 1, %s12
  %s15 = scalar_select 0, %s14, %s12
  %v16 = vstv %s10
  %17 = vst [vmem:[#allocation2] sm:$0x1] %v16
  // Predicated region
  $region2: #{tpu_custom_call.1} parent=0 // pred_check
    _
  $region3: #{tpu_custom_call.1} parent=0 // pred_check_branch
    %19 = sbr.rel (0) target = $region5
  $region4: #{tpu_custom_call.1} parent=0 // pred_region
    _
  $region5: #{tpu_custom_call.1} parent=0 // pred_fallthru
    _
  // Predicated region
  $region6: #{tpu_custom_call.1} parent=0 // pred_check
    _
  $region7: #{tpu_custom_call.1} parent=0 // pred_check_branch
    %21 = sbr.rel (0) target = $region9
  $region8: #{tpu_custom_call.1} parent=0 // pred_region
    _
  $region9: #{tpu_custom_call.1} parent=0 // pred_fallthru
    _
  // Predicated region
  $region10: #{tpu_custom_call.1} parent=0 // pred_check
    _
  $region11: #{tpu_custom_call.1} parent=0 // pred_check_branch
    %23 = sbr.rel (0) target = $region13
  $region12: #{tpu_custom_call.1} parent=0 // pred_region
    _
  $region13: #{tpu_custom_call.1} parent=0 // pred_fallthru
    _
  // Predicated region
  $region14: #{tpu_custom_call.1} parent=0 // pred_check
    _
  $region15: #{tpu_custom_call.1} parent=0 // pred_check_branch
    %25 = sbr.rel (0) target = $region17
  $region16: #{tpu_custom_call.1} parent=0 // pred_region
    _
  $region17: #{tpu_custom_call.1} parent=0 // pred_fallthru
    _
  // Predicated region
  $region18: #{tpu_custom_call.1} parent=0 // pred_check
    _
  $region19: #{tpu_custom_call.1} parent=0 // pred_check_branch
    %27 = sbr.rel (0) target = $region21
  $region20: #{tpu_custom_call.1} parent=0 // pred_region
    _
  $region21: #{tpu_custom_call.1} parent=0 // pred_fallthru
    _
  // Predicated region
  $region22: #{tpu_custom_call.1} parent=0 // pred_check
    _
  $region23: #{tpu_custom_call.1} parent=0 // pred_check_branch
    %29 = sbr.rel (0) target = $region25
  $region24: #{tpu_custom_call.1} parent=0 // pred_region
    _
  $region25: #{tpu_custom_call.1} parent=0 // pred_fallthru
    _
  // Predicated region
  $region26: #{tpu_custom_call.1} parent=0 // pred_check
    _
  $region27: #{tpu_custom_call.1} parent=0 // pred_check_branch
    %31 = sbr.rel (0) target = $region29
  $region28: #{tpu_custom_call.1} parent=0 // pred_region
    _
  $region29: #{tpu_custom_call.1} parent=0 // pred_fallthru
    _
  // Predicated region
  $region30: #{tpu_custom_call.1} parent=0 // pred_check
    _
  $region31: #{tpu_custom_call.1} parent=0 // pred_check_branch
    %33 = sbr.rel (0) target = $region33
  $region32: #{tpu_custom_call.1} parent=0 // pred_region
    _
  $region33: #{tpu_custom_call.1} parent=0 // pred_fallthru
    _
  // Predicated region
  $region34: #{tpu_custom_call.1} parent=0 // pred_check
    _
  $region35: #{tpu_custom_call.1} parent=0 // pred_check_branch
    %35 = sbr.rel (0) target = $region37
  $region36: #{tpu_custom_call.1} parent=0 // pred_region
    _
  $region37: #{tpu_custom_call.1} parent=0 // pred_fallthru
    _
  // Predicated region
  $region38: #{tpu_custom_call.1} parent=0 // pred_check
    _
  $region39: #{tpu_custom_call.1} parent=0 // pred_check_branch
    %37 = sbr.rel (0) target = $region41
  $region40: #{tpu_custom_call.1} parent=0 // pred_region
    _
  $region41: #{tpu_custom_call.1} parent=0 // pred_fallthru
    _
  // Predicated region
  $region42: #{tpu_custom_call.1} parent=0 // pred_check
    _
  $region43: #{tpu_custom_call.1} parent=0 // pred_check_branch
    %39 = sbr.rel (0) target = $region45
  $region44: #{tpu_custom_call.1} parent=0 // pred_region
    _
  $region45: #{tpu_custom_call.1} parent=0 // pred_fallthru
    _
  %v41 = vld [vmem:[%s0] sm:$0xff]
  %v42 = vld [vmem:[%s0 + $0x8] sm:$0xff]
  %v43 = vld [vmem:[%s0 + $0x10] sm:$0xff]
  %v44 = vld [vmem:[%s0 + $0x18] sm:$0xff]
  %v45 = vld [vmem:[%s0 + $0x20] sm:$0xf]
  %v46 = vld [vmem:[%s1] sm:$0xff]
  %v47 = vld [vmem:[%s1 + $0x8] sm:$0xff]
  %v48 = vld [vmem:[%s1 + $0x10] sm:$0xff]
  %v49 = vld [vmem:[%s1 + $0x18] sm:$0xff]
  %v50 = vld [vmem:[%s1 + $0x20] sm:$0xff]
  %v51 = vld [vmem:[%s1 + $0x28] sm:$0xff]
  %v52 = vld [vmem:[%s1 + $0x30] sm:$0xff]
  %v53 = vld [vmem:[%s1 + $0x38] sm:$0xff]
  %v54 = vld [vmem:[%s1 + $0x40] sm:$0xff]
  %v55 = vld [vmem:[%s1 + $0x48] sm:$0xff]
  %v56 = vld [vmem:[%s1 + $0x50] sm:$0xff]
  %v57 = vld [vmem:[%s1 + $0x58] sm:$0xff]
  %v58 = vld [vmem:[%s1 + $0x60] sm:$0xff]
  %v59 = vld [vmem:[%s1 + $0x68] sm:$0xff]
  %v60 = vld [vmem:[%s1 + $0x70] sm:$0xff]
  %v61 = vld [vmem:[%s1 + $0x78] sm:$0xff]
  %v62 = vld [vmem:[%s1 + $0x80] sm:$0xff]
  %v63 = vld [vmem:[%s1 + $0x88] sm:$0xff]
  %v64 = vld [vmem:[%s1 + $0x90] sm:$0xff]
  %v65 = vld [vmem:[%s1 + $0x98] sm:$0xff]
  %v66 = vld [vmem:[%s1 + $0xa0] sm:$0xff]
  %v67 = vld [vmem:[%s1 + $0xa8] sm:$0xff]
  %v68 = vld [vmem:[%s1 + $0xb0] sm:$0xff]
  %v69 = vld [vmem:[%s1 + $0xb8] sm:$0xff]
  %v70 = vld [vmem:[%s1 + $0xc0] sm:$0xff]
  %v71 = vld [vmem:[%s1 + $0xc8] sm:$0xff]
  %v72 = vld [vmem:[%s1 + $0xd0] sm:$0xff]
  %v73 = vld [vmem:[%s1 + $0xd8] sm:$0xff]
  %v74 = vld [vmem:[%s1 + $0xe0] sm:$0xff]
  %v75 = vld [vmem:[%s1 + $0xe8] sm:$0xff]
  %v76 = vld [vmem:[%s1 + $0xf0] sm:$0xff]
  %v77 = vld [vmem:[%s1 + $0xf8] sm:$0xff]
  %v78 = vld [vmem:[%s1 + $0x100] sm:$0xff]
  %v79 = vld [vmem:[%s1 + $0x108] sm:$0xff]
  %v80 = vld [vmem:[%s1 + $0x110] sm:$0xff]
  %v81 = vld [vmem:[%s1 + $0x118] sm:$0xff]
  %v82 = vld [vmem:[%s1 + $0x120] sm:$0xff]
  %v83 = vld [vmem:[%s1 + $0x128] sm:$0xff]
  %v84 = vld [vmem:[%s1 + $0x130] sm:$0xff]
  %v85 = vld [vmem:[%s1 + $0x138] sm:$0xff]
  %v86 = vld [vmem:[%s1 + $0x140] sm:$0xff]
  %v87 = vld [vmem:[%s1 + $0x148] sm:$0xff]
  %v88 = vld [vmem:[%s1 + $0x150] sm:$0xff]
  %v89 = vld [vmem:[%s1 + $0x158] sm:$0xff]
  %v90 = vld [vmem:[%s1 + $0x160] sm:$0xff]
  %v91 = vld [vmem:[%s1 + $0x168] sm:$0xff]
  %v92 = vld [vmem:[%s1 + $0x170] sm:$0xff]
  %v93 = vld [vmem:[%s1 + $0x178] sm:$0xff]
  %v94 = vld [vmem:[%s1 + $0x180] sm:$0xff]
  %v95 = vld [vmem:[%s1 + $0x188] sm:$0xff]
  %v96 = vld [vmem:[%s1 + $0x190] sm:$0xff]
  %v97 = vld [vmem:[%s1 + $0x198] sm:$0xff]
  %v98 = vld [vmem:[%s1 + $0x1a0] sm:$0xff]
  %v99 = vld [vmem:[%s1 + $0x1a8] sm:$0xff]
  %v100 = vld [vmem:[%s1 + $0x1b0] sm:$0xff]
  %v101 = vld [vmem:[%s1 + $0x1b8] sm:$0xff]
  %v102 = vld [vmem:[%s1 + $0x1c0] sm:$0xff]
  %v103 = vld [vmem:[%s1 + $0x1c8] sm:$0xff]
  %v104 = vld [vmem:[%s1 + $0x1d0] sm:$0xff]
  %v105 = vld [vmem:[%s1 + $0x1d8] sm:$0xff]
  %v106 = vld [vmem:[%s1 + $0x1e0] sm:$0xff]
  %v107 = vld [vmem:[%s1 + $0x1e8] sm:$0xff]
  %v108 = vld [vmem:[%s1 + $0x1f0] sm:$0xff]
  %v109 = vld [vmem:[%s1 + $0x1f8] sm:$0xff]
  %v110 = vld [vmem:[%s1 + $0x200] sm:$0xff]
  %v111 = vld [vmem:[%s1 + $0x208] sm:$0xff]
  %v112 = vld [vmem:[%s1 + $0x210] sm:$0xff]
  %v113 = vld [vmem:[%s1 + $0x218] sm:$0xff]
  %v114 = vld [vmem:[%s1 + $0x220] sm:$0xff]
  %v115 = vld [vmem:[%s1 + $0x228] sm:$0xff]
  %v116 = vld [vmem:[%s1 + $0x230] sm:$0xff]
  %v117 = vld [vmem:[%s1 + $0x238] sm:$0xff]
  %v118 = vld [vmem:[%s1 + $0x240] sm:$0xff]
  %v119 = vld [vmem:[%s1 + $0x248] sm:$0xff]
  %v120 = vld [vmem:[%s1 + $0x250] sm:$0xff]
  %v121 = vld [vmem:[%s1 + $0x258] sm:$0xff]
  %v122 = vld [vmem:[%s1 + $0x260] sm:$0xff]
  %v123 = vld [vmem:[%s1 + $0x268] sm:$0xff]
  %v124 = vld [vmem:[%s1 + $0x270] sm:$0xff]
  %v125 = vld [vmem:[%s1 + $0x278] sm:$0xff]
  %v126 = vld [vmem:[%s1 + $0x280] sm:$0xff]
  %v127 = vld [vmem:[%s1 + $0x288] sm:$0xff]
  %v128 = vld [vmem:[%s1 + $0x290] sm:$0xff]
  %v129 = vld [vmem:[%s1 + $0x298] sm:$0xff]
  %v130 = vld [vmem:[%s1 + $0x2a0] sm:$0xff]
  %v131 = vld [vmem:[%s1 + $0x2a8] sm:$0xff]
  %v132 = vld [vmem:[%s1 + $0x2b0] sm:$0xff]
  %v133 = vld [vmem:[%s1 + $0x2b8] sm:$0xff]
  %v134 = vld [vmem:[%s1 + $0x2c0] sm:$0xff]
  %v135 = vld [vmem:[%s1 + $0x2c8] sm:$0xff]
  %v136 = vld [vmem:[%s1 + $0x2d0] sm:$0xff]
  %v137 = vld [vmem:[%s1 + $0x2d8] sm:$0xff]
  %v138 = vld [vmem:[%s1 + $0x2e0] sm:$0xff]
  %v139 = vld [vmem:[%s1 + $0x2e8] sm:$0xff]
  %v140 = vld [vmem:[%s1 + $0x2f0] sm:$0xff]
  %v141 = vld [vmem:[%s1 + $0x2f8] sm:$0xff]
  %v142 = vld [vmem:[%s1 + $0x300] sm:$0xff]
  %v143 = vld [vmem:[%s1 + $0x308] sm:$0xff]
  %v144 = vld [vmem:[%s1 + $0x310] sm:$0xff]
  %v145 = vld [vmem:[%s1 + $0x318] sm:$0xff]
  %v146 = vld [vmem:[%s1 + $0x320] sm:$0xff]
  %v147 = vld [vmem:[%s1 + $0x328] sm:$0xff]
  %v148 = vld [vmem:[%s1 + $0x330] sm:$0xff]
  %v149 = vld [vmem:[%s1 + $0x338] sm:$0xff]
  %v150 = vld [vmem:[%s1 + $0x340] sm:$0xff]
  %v151 = vld [vmem:[%s1 + $0x348] sm:$0xff]
  %v152 = vld [vmem:[%s1 + $0x350] sm:$0xff]
  %v153 = vld [vmem:[%s1 + $0x358] sm:$0xff]
  %v154 = vld [vmem:[%s1 + $0x360] sm:$0xff]
  %v155 = vld [vmem:[%s1 + $0x368] sm:$0xff]
  %v156 = vld [vmem:[%s1 + $0x370] sm:$0xff]
  %v157 = vld [vmem:[%s1 + $0x378] sm:$0xff]
  %v158 = vld [vmem:[%s1 + $0x380] sm:$0xff]
  %v159 = vld [vmem:[%s1 + $0x388] sm:$0xff]
  %v160 = vld [vmem:[%s1 + $0x390] sm:$0xff]
  %v161 = vld [vmem:[%s1 + $0x398] sm:$0xff]
  %v162 = vld [vmem:[%s1 + $0x3a0] sm:$0xff]
  %v163 = vld [vmem:[%s1 + $0x3a8] sm:$0xff]
  %v164 = vld [vmem:[%s1 + $0x3b0] sm:$0xff]
  %v165 = vld [vmem:[%s1 + $0x3b8] sm:$0xff]
  %v166 = vld [vmem:[%s1 + $0x3c0] sm:$0xff]
  %v167 = vld [vmem:[%s1 + $0x3c8] sm:$0xff]
  %v168 = vld [vmem:[%s1 + $0x3d0] sm:$0xff]
  %v169 = vld [vmem:[%s1 + $0x3d8] sm:$0xff]
  %v170 = vld [vmem:[%s1 + $0x3e0] sm:$0xff]
  %v171 = vld [vmem:[%s1 + $0x3e8] sm:$0xff]
  %v172 = vld [vmem:[%s1 + $0x3f0] sm:$0xff]
  %v173 = vld [vmem:[%s1 + $0x3f8] sm:$0xff]
  %v174 = vld [vmem:[%s1 + $0x400] sm:$0xff]
  %v175 = vld [vmem:[%s1 + $0x408] sm:$0xff]
  %v176 = vld [vmem:[%s1 + $0x410] sm:$0xff]
  %v177 = vld [vmem:[%s1 + $0x418] sm:$0xff]
  %v178 = vld [vmem:[%s1 + $0x420] sm:$0xff]
  %v179 = vld [vmem:[%s1 + $0x428] sm:$0xff]
  %v180 = vld [vmem:[%s1 + $0x430] sm:$0xff]
  %v181 = vld [vmem:[%s1 + $0x438] sm:$0xff]
  %v182 = vld [vmem:[%s1 + $0x440] sm:$0xff]
  %v183 = vld [vmem:[%s1 + $0x448] sm:$0xff]
  %v184 = vld [vmem:[%s1 + $0x450] sm:$0xff]
  %v185 = vld [vmem:[%s1 + $0x458] sm:$0xff]
  %v186 = vld [vmem:[%s1 + $0x460] sm:$0xff]
  %v187 = vld [vmem:[%s1 + $0x468] sm:$0xff]
  %v188 = vld [vmem:[%s1 + $0x470] sm:$0xff]
  %v189 = vld [vmem:[%s1 + $0x478] sm:$0xff]
  %v190 = vld [vmem:[%s2] sm:$0x3]
  %v192 = vlaneseq
  %v193 = vshrl.u32 %v192, 7
  %v194 = vsub.s32 0, %v193
  %v195 = vrot.slane %v190, %v194
  %v196 = vlaneseq
  %v197 = vshrl.u32 %v196, 7
  %v198 = vsub.s32 1, %v197
  %v199 = vrot.slane %v190, %v198
  %v207 = vunpack.c.l.b16 %v41
  %v208 = vunpack.c.h.b16 %v41
  %v209 = vunpack.c.l.b16 %v42
  %v210 = vunpack.c.h.b16 %v42
  %v211 = vunpack.c.l.b16 %v43
  %v212 = vunpack.c.h.b16 %v43
  %v213 = vunpack.c.l.b16 %v44
  %v214 = vunpack.c.h.b16 %v44
  %v215 = vunpack.c.l.b16 %v45
  %v216 = vpack.c.b16 %v207, %v207
  %v217 = vpack.c.b16 %v208, %v208
  %v218 = vpack.c.b16 %v209, %v209
  %v219 = vpack.c.b16 %v210, %v210
  %v220 = vpack.c.b16 %v211, %v211
  %v221 = vpack.c.b16 %v212, %v212
  %v222 = vpack.c.b16 %v213, %v213
  %v223 = vpack.c.b16 %v214, %v214
  %v224 = vpack.c.b16 %v215, %v215
  %v378 = vunpack.c.l.b16 %v46
  %v379 = vunpack.c.h.b16 %v46
  %v380 = vunpack.c.l.b16 %v47
  %v381 = vunpack.c.h.b16 %v47
  %v382 = vunpack.c.l.b16 %v48
  %v383 = vunpack.c.h.b16 %v48
  %v384 = vunpack.c.l.b16 %v49
  %v385 = vunpack.c.h.b16 %v49
  %v386 = vunpack.c.l.b16 %v50
  %v387 = vunpack.c.h.b16 %v50
  %v388 = vunpack.c.l.b16 %v51
  %v389 = vunpack.c.h.b16 %v51
  %v390 = vunpack.c.l.b16 %v52
  %v391 = vunpack.c.h.b16 %v52
  %v392 = vunpack.c.l.b16 %v53
  %v393 = vunpack.c.h.b16 %v53
  %v394 = vunpack.c.l.b16 %v54
  %v395 = vunpack.c.h.b16 %v54
  %v396 = vunpack.c.l.b16 %v55
  %v397 = vunpack.c.h.b16 %v55
  %v398 = vunpack.c.l.b16 %v56
  %v399 = vunpack.c.h.b16 %v56
  %v400 = vunpack.c.l.b16 %v57
  %v401 = vunpack.c.h.b16 %v57
  %v402 = vunpack.c.l.b16 %v58
  %v403 = vunpack.c.h.b16 %v58
  %v404 = vunpack.c.l.b16 %v59
  %v405 = vunpack.c.h.b16 %v59
  %v406 = vunpack.c.l.b16 %v60
  %v407 = vunpack.c.h.b16 %v60
  %v408 = vunpack.c.l.b16 %v61
  %v409 = vunpack.c.h.b16 %v61
  %v410 = vunpack.c.l.b16 %v62
  %v411 = vunpack.c.h.b16 %v62
  %v412 = vunpack.c.l.b16 %v63
  %v413 = vunpack.c.h.b16 %v63
  %v414 = vunpack.c.l.b16 %v64
  %v415 = vunpack.c.h.b16 %v64
  %v416 = vunpack.c.l.b16 %v65
  %v417 = vunpack.c.h.b16 %v65
  %v418 = vunpack.c.l.b16 %v66
  %v419 = vunpack.c.h.b16 %v66
  %v420 = vunpack.c.l.b16 %v67
  %v421 = vunpack.c.h.b16 %v67
  %v422 = vunpack.c.l.b16 %v68
  %v423 = vunpack.c.h.b16 %v68
  %v424 = vunpack.c.l.b16 %v69
  %v425 = vunpack.c.h.b16 %v69
  %v426 = vunpack.c.l.b16 %v70
  %v427 = vunpack.c.h.b16 %v70
  %v428 = vunpack.c.l.b16 %v71
  %v429 = vunpack.c.h.b16 %v71
  %v430 = vunpack.c.l.b16 %v72
  %v431 = vunpack.c.h.b16 %v72
  %v432 = vunpack.c.l.b16 %v73
  %v433 = vunpack.c.h.b16 %v73
  %v434 = vunpack.c.l.b16 %v74
  %v435 = vunpack.c.h.b16 %v74
  %v436 = vunpack.c.l.b16 %v75
  %v437 = vunpack.c.h.b16 %v75
  %v438 = vunpack.c.l.b16 %v76
  %v439 = vunpack.c.h.b16 %v76
  %v440 = vunpack.c.l.b16 %v77
  %v441 = vunpack.c.h.b16 %v77
  %v442 = vunpack.c.l.b16 %v78
  %v443 = vunpack.c.h.b16 %v78
  %v444 = vunpack.c.l.b16 %v79
  %v445 = vunpack.c.h.b16 %v79
  %v446 = vunpack.c.l.b16 %v80
  %v447 = vunpack.c.h.b16 %v80
  %v448 = vunpack.c.l.b16 %v81
  %v449 = vunpack.c.h.b16 %v81
  %v450 = vunpack.c.l.b16 %v82
  %v451 = vunpack.c.h.b16 %v82
  %v452 = vunpack.c.l.b16 %v83
  %v453 = vunpack.c.h.b16 %v83
  %v454 = vunpack.c.l.b16 %v84
  %v455 = vunpack.c.h.b16 %v84
  %v456 = vunpack.c.l.b16 %v85
  %v457 = vunpack.c.h.b16 %v85
  %v458 = vunpack.c.l.b16 %v86
  %v459 = vunpack.c.h.b16 %v86
  %v460 = vunpack.c.l.b16 %v87
  %v461 = vunpack.c.h.b16 %v87
  %v462 = vunpack.c.l.b16 %v88
  %v463 = vunpack.c.h.b16 %v88
  %v464 = vunpack.c.l.b16 %v89
  %v465 = vunpack.c.h.b16 %v89
  %v466 = vunpack.c.l.b16 %v90
  %v467 = vunpack.c.h.b16 %v90
  %v468 = vunpack.c.l.b16 %v91
  %v469 = vunpack.c.h.b16 %v91
  %v470 = vunpack.c.l.b16 %v92
  %v471 = vunpack.c.h.b16 %v92
  %v472 = vunpack.c.l.b16 %v93
  %v473 = vunpack.c.h.b16 %v93
  %v474 = vunpack.c.l.b16 %v94
  %v475 = vunpack.c.h.b16 %v94
  %v476 = vunpack.c.l.b16 %v95
  %v477 = vunpack.c.h.b16 %v95
  %v478 = vunpack.c.l.b16 %v96
  %v479 = vunpack.c.h.b16 %v96
  %v480 = vunpack.c.l.b16 %v97
  %v481 = vunpack.c.h.b16 %v97
  %v482 = vunpack.c.l.b16 %v98
  %v483 = vunpack.c.h.b16 %v98
  %v484 = vunpack.c.l.b16 %v99
  %v485 = vunpack.c.h.b16 %v99
  %v486 = vunpack.c.l.b16 %v100
  %v487 = vunpack.c.h.b16 %v100
  %v488 = vunpack.c.l.b16 %v101
  %v489 = vunpack.c.h.b16 %v101
  %v490 = vunpack.c.l.b16 %v102
  %v491 = vunpack.c.h.b16 %v102
  %v492 = vunpack.c.l.b16 %v103
  %v493 = vunpack.c.h.b16 %v103
  %v494 = vunpack.c.l.b16 %v104
  %v495 = vunpack.c.h.b16 %v104
  %v496 = vunpack.c.l.b16 %v105
  %v497 = vunpack.c.h.b16 %v105
  %v498 = vunpack.c.l.b16 %v106
  %v499 = vunpack.c.h.b16 %v106
  %v500 = vunpack.c.l.b16 %v107
  %v501 = vunpack.c.h.b16 %v107
  %v502 = vunpack.c.l.b16 %v108
  %v503 = vunpack.c.h.b16 %v108
  %v504 = vunpack.c.l.b16 %v109
  %v505 = vunpack.c.h.b16 %v109
  %v506 = vunpack.c.l.b16 %v110
  %v507 = vunpack.c.h.b16 %v110
  %v508 = vunpack.c.l.b16 %v111
  %v509 = vunpack.c.h.b16 %v111
  %v510 = vunpack.c.l.b16 %v112
  %v511 = vunpack.c.h.b16 %v112
  %v512 = vunpack.c.l.b16 %v113
  %v513 = vunpack.c.h.b16 %v113
  %v514 = vunpack.c.l.b16 %v114
  %v515 = vunpack.c.h.b16 %v114
  %v516 = vunpack.c.l.b16 %v115
  %v517 = vunpack.c.h.b16 %v115
  %v518 = vunpack.c.l.b16 %v116
  %v519 = vunpack.c.h.b16 %v116
  %v520 = vunpack.c.l.b16 %v117
  %v521 = vunpack.c.h.b16 %v117
  %v522 = vunpack.c.l.b16 %v118
  %v523 = vunpack.c.h.b16 %v118
  %v524 = vunpack.c.l.b16 %v119
  %v525 = vunpack.c.h.b16 %v119
  %v526 = vunpack.c.l.b16 %v120
  %v527 = vunpack.c.h.b16 %v120
  %v528 = vunpack.c.l.b16 %v121
  %v529 = vunpack.c.h.b16 %v121
  %v530 = vunpack.c.l.b16 %v122
  %v531 = vunpack.c.h.b16 %v122
  %v532 = vunpack.c.l.b16 %v123
  %v533 = vunpack.c.h.b16 %v123
  %v534 = vunpack.c.l.b16 %v124
  %v535 = vunpack.c.h.b16 %v124
  %v536 = vunpack.c.l.b16 %v125
  %v537 = vunpack.c.h.b16 %v125
  %v538 = vunpack.c.l.b16 %v126
  %v539 = vunpack.c.h.b16 %v126
  %v540 = vunpack.c.l.b16 %v127
  %v541 = vunpack.c.h.b16 %v127
  %v542 = vunpack.c.l.b16 %v128
  %v543 = vunpack.c.h.b16 %v128
  %v544 = vunpack.c.l.b16 %v129
  %v545 = vunpack.c.h.b16 %v129
  %v546 = vunpack.c.l.b16 %v130
  %v547 = vunpack.c.h.b16 %v130
  %v548 = vunpack.c.l.b16 %v131
  %v549 = vunpack.c.h.b16 %v131
  %v550 = vunpack.c.l.b16 %v132
  %v551 = vunpack.c.h.b16 %v132
  %v552 = vunpack.c.l.b16 %v133
  %v553 = vunpack.c.h.b16 %v133
  %v554 = vunpack.c.l.b16 %v134
  %v555 = vunpack.c.h.b16 %v134
  %v556 = vunpack.c.l.b16 %v135
  %v557 = vunpack.c.h.b16 %v135
  %v558 = vunpack.c.l.b16 %v136
  %v559 = vunpack.c.h.b16 %v136
  %v560 = vunpack.c.l.b16 %v137
  %v561 = vunpack.c.h.b16 %v137
  %v562 = vunpack.c.l.b16 %v138
  %v563 = vunpack.c.h.b16 %v138
  %v564 = vunpack.c.l.b16 %v139
  %v565 = vunpack.c.h.b16 %v139
  %v566 = vunpack.c.l.b16 %v140
  %v567 = vunpack.c.h.b16 %v140
  %v568 = vunpack.c.l.b16 %v141
  %v569 = vunpack.c.h.b16 %v141
  %v570 = vunpack.c.l.b16 %v142
  %v571 = vunpack.c.h.b16 %v142
  %v572 = vunpack.c.l.b16 %v143
  %v573 = vunpack.c.h.b16 %v143
  %v574 = vunpack.c.l.b16 %v144
  %v575 = vunpack.c.h.b16 %v144
  %v576 = vunpack.c.l.b16 %v145
  %v577 = vunpack.c.h.b16 %v145
  %v578 = vunpack.c.l.b16 %v146
  %v579 = vunpack.c.h.b16 %v146
  %v580 = vunpack.c.l.b16 %v147
  %v581 = vunpack.c.h.b16 %v147
  %v582 = vunpack.c.l.b16 %v148
  %v583 = vunpack.c.h.b16 %v148
  %v584 = vunpack.c.l.b16 %v149
  %v585 = vunpack.c.h.b16 %v149
  %v586 = vunpack.c.l.b16 %v150
  %v587 = vunpack.c.h.b16 %v150
  %v588 = vunpack.c.l.b16 %v151
  %v589 = vunpack.c.h.b16 %v151
  %v590 = vunpack.c.l.b16 %v152
  %v591 = vunpack.c.h.b16 %v152
  %v592 = vunpack.c.l.b16 %v153
  %v593 = vunpack.c.h.b16 %v153
  %v594 = vunpack.c.l.b16 %v154
  %v595 = vunpack.c.h.b16 %v154
  %v596 = vunpack.c.l.b16 %v155
  %v597 = vunpack.c.h.b16 %v155
  %v598 = vunpack.c.l.b16 %v156
  %v599 = vunpack.c.h.b16 %v156
  %v600 = vunpack.c.l.b16 %v157
  %v601 = vunpack.c.h.b16 %v157
  %v602 = vunpack.c.l.b16 %v158
  %v603 = vunpack.c.h.b16 %v158
  %v604 = vunpack.c.l.b16 %v159
  %v605 = vunpack.c.h.b16 %v159
  %v606 = vunpack.c.l.b16 %v160
  %v607 = vunpack.c.h.b16 %v160
  %v608 = vunpack.c.l.b16 %v161
  %v609 = vunpack.c.h.b16 %v161
  %v610 = vunpack.c.l.b16 %v162
  %v611 = vunpack.c.h.b16 %v162
  %v612 = vunpack.c.l.b16 %v163
  %v613 = vunpack.c.h.b16 %v163
  %v614 = vunpack.c.l.b16 %v164
  %v615 = vunpack.c.h.b16 %v164
  %v616 = vunpack.c.l.b16 %v165
  %v617 = vunpack.c.h.b16 %v165
  %v618 = vunpack.c.l.b16 %v166
  %v619 = vunpack.c.h.b16 %v166
  %v620 = vunpack.c.l.b16 %v167
  %v621 = vunpack.c.h.b16 %v167
  %v622 = vunpack.c.l.b16 %v168
  %v623 = vunpack.c.h.b16 %v168
  %v624 = vunpack.c.l.b16 %v169
  %v625 = vunpack.c.h.b16 %v169
  %v626 = vunpack.c.l.b16 %v170
  %v627 = vunpack.c.h.b16 %v170
  %v628 = vunpack.c.l.b16 %v171
  %v629 = vunpack.c.h.b16 %v171
  %v630 = vunpack.c.l.b16 %v172
  %v631 = vunpack.c.h.b16 %v172
  %v632 = vunpack.c.l.b16 %v173
  %v633 = vunpack.c.h.b16 %v173
  %v634 = vunpack.c.l.b16 %v174
  %v635 = vunpack.c.h.b16 %v174
  %v636 = vunpack.c.l.b16 %v175
  %v637 = vunpack.c.h.b16 %v175
  %v638 = vunpack.c.l.b16 %v176
  %v639 = vunpack.c.h.b16 %v176
  %v640 = vunpack.c.l.b16 %v177
  %v641 = vunpack.c.h.b16 %v177
  %v642 = vunpack.c.l.b16 %v178
  %v643 = vunpack.c.h.b16 %v178
  %v644 = vunpack.c.l.b16 %v179
  %v645 = vunpack.c.h.b16 %v179
  %v646 = vunpack.c.l.b16 %v180
  %v647 = vunpack.c.h.b16 %v180
  %v648 = vunpack.c.l.b16 %v181
  %v649 = vunpack.c.h.b16 %v181
  %v650 = vunpack.c.l.b16 %v182
  %v651 = vunpack.c.h.b16 %v182
  %v652 = vunpack.c.l.b16 %v183
  %v653 = vunpack.c.h.b16 %v183
  %v654 = vunpack.c.l.b16 %v184
  %v655 = vunpack.c.h.b16 %v184
  %v656 = vunpack.c.l.b16 %v185
  %v657 = vunpack.c.h.b16 %v185
  %v658 = vunpack.c.l.b16 %v186
  %v659 = vunpack.c.h.b16 %v186
  %v660 = vunpack.c.l.b16 %v187
  %v661 = vunpack.c.h.b16 %v187
  %v662 = vunpack.c.l.b16 %v188
  %v663 = vunpack.c.h.b16 %v188
  %v664 = vunpack.c.l.b16 %v189
  %v665 = vunpack.c.h.b16 %v189
  %v666 = vpack.c.b16 %v380, %v378
  %v667 = vpack.c.b16 %v381, %v379
  %v668 = vpack.c.b16 %v384, %v382
  %v669 = vpack.c.b16 %v385, %v383
  %v670 = vpack.c.b16 %v388, %v386
  %v671 = vpack.c.b16 %v389, %v387
  %v672 = vpack.c.b16 %v392, %v390
  %v673 = vpack.c.b16 %v393, %v391
  %v674 = vpack.c.b16 %v396, %v394
  %v675 = vpack.c.b16 %v397, %v395
  %v676 = vpack.c.b16 %v400, %v398
  %v677 = vpack.c.b16 %v401, %v399
  %v678 = vpack.c.b16 %v404, %v402
  %v679 = vpack.c.b16 %v405, %v403
  %v680 = vpack.c.b16 %v408, %v406
  %v681 = vpack.c.b16 %v409, %v407
  %v682 = vpack.c.b16 %v412, %v410
  %v683 = vpack.c.b16 %v413, %v411
  %v684 = vpack.c.b16 %v416, %v414
  %v685 = vpack.c.b16 %v417, %v415
  %v686 = vpack.c.b16 %v420, %v418
  %v687 = vpack.c.b16 %v421, %v419
  %v688 = vpack.c.b16 %v424, %v422
  %v689 = vpack.c.b16 %v425, %v423
  %v690 = vpack.c.b16 %v428, %v426
  %v691 = vpack.c.b16 %v429, %v427
  %v692 = vpack.c.b16 %v432, %v430
  %v693 = vpack.c.b16 %v433, %v431
  %v694 = vpack.c.b16 %v436, %v434
  %v695 = vpack.c.b16 %v437, %v435
  %v696 = vpack.c.b16 %v440, %v438
  %v697 = vpack.c.b16 %v441, %v439
  %v698 = vpack.c.b16 %v444, %v442
  %v699 = vpack.c.b16 %v445, %v443
  %v700 = vpack.c.b16 %v448, %v446
  %v701 = vpack.c.b16 %v449, %v447
  %v702 = vpack.c.b16 %v452, %v450
  %v703 = vpack.c.b16 %v453, %v451
  %v704 = vpack.c.b16 %v456, %v454
  %v705 = vpack.c.b16 %v457, %v455
  %v706 = vpack.c.b16 %v460, %v458
  %v707 = vpack.c.b16 %v461, %v459
  %v708 = vpack.c.b16 %v464, %v462
  %v709 = vpack.c.b16 %v465, %v463
  %v710 = vpack.c.b16 %v468, %v466
  %v711 = vpack.c.b16 %v469, %v467
  %v712 = vpack.c.b16 %v472, %v470
  %v713 = vpack.c.b16 %v473, %v471
  %v714 = vpack.c.b16 %v476, %v474
  %v715 = vpack.c.b16 %v477, %v475
  %v716 = vpack.c.b16 %v480, %v478
  %v717 = vpack.c.b16 %v481, %v479
  %v718 = vpack.c.b16 %v484, %v482
  %v719 = vpack.c.b16 %v485, %v483
  %v720 = vpack.c.b16 %v488, %v486
  %v721 = vpack.c.b16 %v489, %v487
  %v722 = vpack.c.b16 %v492, %v490
  %v723 = vpack.c.b16 %v493, %v491
  %v724 = vpack.c.b16 %v496, %v494
  %v725 = vpack.c.b16 %v497, %v495
  %v726 = vpack.c.b16 %v500, %v498
  %v727 = vpack.c.b16 %v501, %v499
  %v728 = vpack.c.b16 %v504, %v502
  %v729 = vpack.c.b16 %v505, %v503
  %v730 = vpack.c.b16 %v508, %v506
  %v731 = vpack.c.b16 %v509, %v507
  %v732 = vpack.c.b16 %v512, %v510
  %v733 = vpack.c.b16 %v513, %v511
  %v734 = vpack.c.b16 %v516, %v514
  %v735 = vpack.c.b16 %v517, %v515
  %v736 = vpack.c.b16 %v520, %v518
  %v737 = vpack.c.b16 %v521, %v519
  %v738 = vpack.c.b16 %v524, %v522
  %v739 = vpack.c.b16 %v525, %v523
  %v740 = vpack.c.b16 %v528, %v526
  %v741 = vpack.c.b16 %v529, %v527
  %v742 = vpack.c.b16 %v532, %v530
  %v743 = vpack.c.b16 %v533, %v531
  %v744 = vpack.c.b16 %v536, %v534
  %v745 = vpack.c.b16 %v537, %v535
  %v746 = vpack.c.b16 %v540, %v538
  %v747 = vpack.c.b16 %v541, %v539
  %v748 = vpack.c.b16 %v544, %v542
  %v749 = vpack.c.b16 %v545, %v543
  %v750 = vpack.c.b16 %v548, %v546
  %v751 = vpack.c.b16 %v549, %v547
  %v752 = vpack.c.b16 %v552, %v550
  %v753 = vpack.c.b16 %v553, %v551
  %v754 = vpack.c.b16 %v556, %v554
  %v755 = vpack.c.b16 %v557, %v555
  %v756 = vpack.c.b16 %v560, %v558
  %v757 = vpack.c.b16 %v561, %v559
  %v758 = vpack.c.b16 %v564, %v562
  %v759 = vpack.c.b16 %v565, %v563
  %v760 = vpack.c.b16 %v568, %v566
  %v761 = vpack.c.b16 %v569, %v567
  %v762 = vpack.c.b16 %v572, %v570
  %v763 = vpack.c.b16 %v573, %v571
  %v764 = vpack.c.b16 %v576, %v574
  %v765 = vpack.c.b16 %v577, %v575
  %v766 = vpack.c.b16 %v580, %v578
  %v767 = vpack.c.b16 %v581, %v579
  %v768 = vpack.c.b16 %v584, %v582
  %v769 = vpack.c.b16 %v585, %v583
  %v770 = vpack.c.b16 %v588, %v586
  %v771 = vpack.c.b16 %v589, %v587
  %v772 = vpack.c.b16 %v592, %v590
  %v773 = vpack.c.b16 %v593, %v591
  %v774 = vpack.c.b16 %v596, %v594
  %v775 = vpack.c.b16 %v597, %v595
  %v776 = vpack.c.b16 %v600, %v598
  %v777 = vpack.c.b16 %v601, %v599
  %v778 = vpack.c.b16 %v604, %v602
  %v779 = vpack.c.b16 %v605, %v603
  %v780 = vpack.c.b16 %v608, %v606
  %v781 = vpack.c.b16 %v609, %v607
  %v782 = vpack.c.b16 %v612, %v610
  %v783 = vpack.c.b16 %v613, %v611
  %v784 = vpack.c.b16 %v616, %v614
  %v785 = vpack.c.b16 %v617, %v615
  %v786 = vpack.c.b16 %v620, %v618
  %v787 = vpack.c.b16 %v621, %v619
  %v788 = vpack.c.b16 %v624, %v622
  %v789 = vpack.c.b16 %v625, %v623
  %v790 = vpack.c.b16 %v628, %v626
  %v791 = vpack.c.b16 %v629, %v627
  %v792 = vpack.c.b16 %v632, %v630
  %v793 = vpack.c.b16 %v633, %v631
  %v794 = vpack.c.b16 %v636, %v634
  %v795 = vpack.c.b16 %v637, %v635
  %v796 = vpack.c.b16 %v640, %v638
  %v797 = vpack.c.b16 %v641, %v639
  %v798 = vpack.c.b16 %v644, %v642
  %v799 = vpack.c.b16 %v645, %v643
  %v800 = vpack.c.b16 %v648, %v646
  %v801 = vpack.c.b16 %v649, %v647
  %v802 = vpack.c.b16 %v652, %v650
  %v803 = vpack.c.b16 %v653, %v651
  %v804 = vpack.c.b16 %v656, %v654
  %v805 = vpack.c.b16 %v657, %v655
  %v806 = vpack.c.b16 %v660, %v658
  %v807 = vpack.c.b16 %v661, %v659
  %v808 = vpack.c.b16 %v664, %v662
  %v809 = vpack.c.b16 %v665, %v663
  %954 = vmatprep.subr.bf16.mxu0 %v667
  %955 = vmatpush1.bf16.msra.mxu0 %v666
  %956 = vmatprep.subr.bf16.mxu0 %v669
  %957 = vmatpush1.bf16.msra.mxu0 %v668
  %958 = vmatprep.subr.bf16.mxu0 %v671
  %959 = vmatpush1.bf16.msra.mxu0 %v670
  %960 = vmatprep.subr.bf16.mxu0 %v673
  %961 = vmatpush1.bf16.msra.mxu0 %v672
  %962 = vmatprep.subr.bf16.mxu0 %v675
  %963 = vmatpush1.bf16.msra.mxu0 %v674
  %964 = vmatprep.subr.bf16.mxu0 %v677
  %965 = vmatpush1.bf16.msra.mxu0 %v676
  %966 = vmatprep.subr.bf16.mxu0 %v679
  %967 = vmatpush1.bf16.msra.mxu0 %v678
  %968 = vmatprep.subr.bf16.mxu0 %v681
  %969 = vmatpush1.bf16.msra.mxu0 %v680
  %970 = vmatprep.subr.bf16.mxu0 %v683
  %971 = vmatpush1.bf16.msra.mxu0 %v682
  %972 = vmatprep.subr.bf16.mxu0 %v685
  %973 = vmatpush1.bf16.msra.mxu0 %v684
  %974 = vmatprep.subr.bf16.mxu0 %v687
  %975 = vmatpush1.bf16.msra.mxu0 %v686
  %976 = vmatprep.subr.bf16.mxu0 %v689
  %977 = vmatpush1.bf16.msra.mxu0 %v688
  %978 = vmatprep.subr.bf16.mxu0 %v691
  %979 = vmatpush1.bf16.msra.mxu0 %v690
  %980 = vmatprep.subr.bf16.mxu0 %v693
  %981 = vmatpush1.bf16.msra.mxu0 %v692
  %982 = vmatprep.subr.bf16.mxu0 %v695
  %983 = vmatpush1.bf16.msra.mxu0 %v694
  %984 = vmatprep.subr.bf16.mxu0 %v697
  %985 = vmatpush1.bf16.msra.mxu0 %v696
  %986 = vmatprep.mubr.bf16.mxu0 %v217
  %987 = vmatmul.mubr.bf16.gmra.mrb[0].mxu0 %v216
  %v988 = vpop.f32.mrb[0].mxu0
  %v989 = vadd.f32 %v195, %v988
  %v990 = vpop.f32.mrb[0].mxu0
  %v991 = vadd.f32 %v199, %v990
  %v992 = vpop.f32.mrb[0].mxu0
  %v993 = vpop.f32.mrb[0].mxu0
  %994 = vdwg.mxu0
  %995 = vmatprep.subr.bf16.mxu0 %v699
  %996 = vmatpush1.bf16.msra.mxu0 %v698
  %997 = vmatprep.subr.bf16.mxu0 %v701
  %998 = vmatpush1.bf16.msra.mxu0 %v700
  %999 = vmatprep.subr.bf16.mxu0 %v703
  %1000 = vmatpush1.bf16.msra.mxu0 %v702
  %1001 = vmatprep.subr.bf16.mxu0 %v705
  %1002 = vmatpush1.bf16.msra.mxu0 %v704
  %1003 = vmatprep.subr.bf16.mxu0 %v707
  %1004 = vmatpush1.bf16.msra.mxu0 %v706
  %1005 = vmatprep.subr.bf16.mxu0 %v709
  %1006 = vmatpush1.bf16.msra.mxu0 %v708
  %1007 = vmatprep.subr.bf16.mxu0 %v711
  %1008 = vmatpush1.bf16.msra.mxu0 %v710
  %1009 = vmatprep.subr.bf16.mxu0 %v713
  %1010 = vmatpush1.bf16.msra.mxu0 %v712
  %1011 = vmatprep.subr.bf16.mxu0 %v715
  %1012 = vmatpush1.bf16.msra.mxu0 %v714
  %1013 = vmatprep.subr.bf16.mxu0 %v717
  %1014 = vmatpush1.bf16.msra.mxu0 %v716
  %1015 = vmatprep.subr.bf16.mxu0 %v719
  %1016 = vmatpush1.bf16.msra.mxu0 %v718
  %1017 = vmatprep.subr.bf16.mxu0 %v721
  %1018 = vmatpush1.bf16.msra.mxu0 %v720
  %1019 = vmatprep.subr.bf16.mxu0 %v723
  %1020 = vmatpush1.bf16.msra.mxu0 %v722
  %1021 = vmatprep.subr.bf16.mxu0 %v725
  %1022 = vmatpush1.bf16.msra.mxu0 %v724
  %1023 = vmatprep.subr.bf16.mxu0 %v727
  %1024 = vmatpush1.bf16.msra.mxu0 %v726
  %1025 = vmatprep.subr.bf16.mxu0 %v729
  %1026 = vmatpush1.bf16.msra.mxu0 %v728
  %1027 = vmatprep.mubr.bf16.mxu0 %v219
  %1028 = vmatmul.mubr.bf16.gmra.mrb[0].mxu0 %v218
  %v1029 = vpop.f32.mrb[0].mxu0
  %v1030 = vadd.f32 %v989, %v1029
  %v1031 = vpop.f32.mrb[0].mxu0
  %v1032 = vadd.f32 %v991, %v1031
  %v1033 = vpop.f32.mrb[0].mxu0
  %v1034 = vpop.f32.mrb[0].mxu0
  %1035 = vdwg.mxu0
  %1036 = vmatprep.subr.bf16.mxu0 %v731
  %1037 = vmatpush1.bf16.msra.mxu0 %v730
  %1038 = vmatprep.subr.bf16.mxu0 %v733
  %1039 = vmatpush1.bf16.msra.mxu0 %v732
  %1040 = vmatprep.subr.bf16.mxu0 %v735
  %1041 = vmatpush1.bf16.msra.mxu0 %v734
  %1042 = vmatprep.subr.bf16.mxu0 %v737
  %1043 = vmatpush1.bf16.msra.mxu0 %v736
  %1044 = vmatprep.subr.bf16.mxu0 %v739
  %1045 = vmatpush1.bf16.msra.mxu0 %v738
  %1046 = vmatprep.subr.bf16.mxu0 %v741
  %1047 = vmatpush1.bf16.msra.mxu0 %v740
  %1048 = vmatprep.subr.bf16.mxu0 %v743
  %1049 = vmatpush1.bf16.msra.mxu0 %v742
  %1050 = vmatprep.subr.bf16.mxu0 %v745
  %1051 = vmatpush1.bf16.msra.mxu0 %v744
  %1052 = vmatprep.subr.bf16.mxu0 %v747
  %1053 = vmatpush1.bf16.msra.mxu0 %v746
  %1054 = vmatprep.subr.bf16.mxu0 %v749
  %1055 = vmatpush1.bf16.msra.mxu0 %v748
  %1056 = vmatprep.subr.bf16.mxu0 %v751
  %1057 = vmatpush1.bf16.msra.mxu0 %v750
  %1058 = vmatprep.subr.bf16.mxu0 %v753
  %1059 = vmatpush1.bf16.msra.mxu0 %v752
  %1060 = vmatprep.subr.bf16.mxu0 %v755
  %1061 = vmatpush1.bf16.msra.mxu0 %v754
  %1062 = vmatprep.subr.bf16.mxu0 %v757
  %1063 = vmatpush1.bf16.msra.mxu0 %v756
  %1064 = vmatprep.subr.bf16.mxu0 %v759
  %1065 = vmatpush1.bf16.msra.mxu0 %v758
  %1066 = vmatprep.subr.bf16.mxu0 %v761
  %1067 = vmatpush1.bf16.msra.mxu0 %v760
  %1068 = vmatprep.mubr.bf16.mxu0 %v221
  %1069 = vmatmul.mubr.bf16.gmra.mrb[0].mxu0 %v220
  %v1070 = vpop.f32.mrb[0].mxu0
  %v1071 = vadd.f32 %v1030, %v1070
  %v1072 = vpop.f32.mrb[0].mxu0
  %v1073 = vadd.f32 %v1032, %v1072
  %v1074 = vpop.f32.mrb[0].mxu0
  %v1075 = vpop.f32.mrb[0].mxu0
  %1076 = vdwg.mxu0
  %1077 = vmatprep.subr.bf16.mxu0 %v763
  %1078 = vmatpush1.bf16.msra.mxu0 %v762
  %1079 = vmatprep.subr.bf16.mxu0 %v765
  %1080 = vmatpush1.bf16.msra.mxu0 %v764
  %1081 = vmatprep.subr.bf16.mxu0 %v767
  %1082 = vmatpush1.bf16.msra.mxu0 %v766
  %1083 = vmatprep.subr.bf16.mxu0 %v769
  %1084 = vmatpush1.bf16.msra.mxu0 %v768
  %1085 = vmatprep.subr.bf16.mxu0 %v771
  %1086 = vmatpush1.bf16.msra.mxu0 %v770
  %1087 = vmatprep.subr.bf16.mxu0 %v773
  %1088 = vmatpush1.bf16.msra.mxu0 %v772
  %1089 = vmatprep.subr.bf16.mxu0 %v775
  %1090 = vmatpush1.bf16.msra.mxu0 %v774
  %1091 = vmatprep.subr.bf16.mxu0 %v777
  %1092 = vmatpush1.bf16.msra.mxu0 %v776
  %1093 = vmatprep.subr.bf16.mxu0 %v779
  %1094 = vmatpush1.bf16.msra.mxu0 %v778
  %1095 = vmatprep.subr.bf16.mxu0 %v781
  %1096 = vmatpush1.bf16.msra.mxu0 %v780
  %1097 = vmatprep.subr.bf16.mxu0 %v783
  %1098 = vmatpush1.bf16.msra.mxu0 %v782
  %1099 = vmatprep.subr.bf16.mxu0 %v785
  %1100 = vmatpush1.bf16.msra.mxu0 %v784
  %1101 = vmatprep.subr.bf16.mxu0 %v787
  %1102 = vmatpush1.bf16.msra.mxu0 %v786
  %1103 = vmatprep.subr.bf16.mxu0 %v789
  %1104 = vmatpush1.bf16.msra.mxu0 %v788
  %1105 = vmatprep.subr.bf16.mxu0 %v791
  %1106 = vmatpush1.bf16.msra.mxu0 %v790
  %1107 = vmatprep.subr.bf16.mxu0 %v793
  %1108 = vmatpush1.bf16.msra.mxu0 %v792
  %1109 = vmatprep.mubr.bf16.mxu0 %v223
  %1110 = vmatmul.mubr.bf16.gmra.mrb[0].mxu0 %v222
  %v1111 = vpop.f32.mrb[0].mxu0
  %v1112 = vadd.f32 %v1071, %v1111
  %v1113 = vpop.f32.mrb[0].mxu0
  %v1114 = vadd.f32 %v1073, %v1113
  %v1115 = vpop.f32.mrb[0].mxu0
  %v1116 = vpop.f32.mrb[0].mxu0
  %1117 = vdwg.mxu0
  %1118 = vmatprep.subr.bf16.mxu0 %v795
  %1119 = vmatpush1.bf16.msra.mxu0 %v794
  %1120 = vmatprep.subr.bf16.mxu0 %v797
  %1121 = vmatpush1.bf16.msra.mxu0 %v796
  %1122 = vmatprep.subr.bf16.mxu0 %v799
  %1123 = vmatpush1.bf16.msra.mxu0 %v798
  %1124 = vmatprep.subr.bf16.mxu0 %v801
  %1125 = vmatpush1.bf16.msra.mxu0 %v800
  %1126 = vmatprep.subr.bf16.mxu0 %v803
  %1127 = vmatpush1.bf16.msra.mxu0 %v802
  %1128 = vmatprep.subr.bf16.mxu0 %v805
  %1129 = vmatpush1.bf16.msra.mxu0 %v804
  %1130 = vmatprep.subr.bf16.mxu0 %v807
  %1131 = vmatpush1.bf16.msra.mxu0 %v806
  %1132 = vmatprep.subr.bf16.mxu0 %v809
  %1133 = vmatpush1.bf16.msra.mxu0 %v808
  %1134 = vmatprep.subr.bf16.mxu0 0
  %1135 = vmatpush1.bf16.msra.mxu0 0
  %1136 = vmatprep.subr.bf16.mxu0 0
  %1137 = vmatpush1.bf16.msra.mxu0 0
  %1138 = vmatprep.subr.bf16.mxu0 0
  %1139 = vmatpush1.bf16.msra.mxu0 0
  %1140 = vmatprep.subr.bf16.mxu0 0
  %1141 = vmatpush1.bf16.msra.mxu0 0
  %1142 = vmatprep.subr.bf16.mxu0 0
  %1143 = vmatpush1.bf16.msra.mxu0 0
  %1144 = vmatprep.subr.bf16.mxu0 0
  %1145 = vmatpush1.bf16.msra.mxu0 0
  %1146 = vmatprep.subr.bf16.mxu0 0
  %1147 = vmatpush1.bf16.msra.mxu0 0
  %1148 = vmatprep.subr.bf16.mxu0 0
  %1149 = vmatpush1.bf16.msra.mxu0 0
  %1150 = vmatprep.mubr.bf16.mxu0 0
  %1151 = vmatmul.mubr.bf16.gmra.mrb[0].mxu0 %v224
  %v1152 = vpop.f32.mrb[0].mxu0
  %v1153 = vadd.f32 %v1112, %v1152
  %v1154 = vpop.f32.mrb[0].mxu0
  %v1155 = vadd.f32 %v1114, %v1154
  %v1156 = vpop.f32.mrb[0].mxu0
  %v1157 = vpop.f32.mrb[0].mxu0
  %1158 = vdwg.mxu0
  %v1159 = vmax.f32 %v1153, 0.0
  %v1160 = vmax.f32 %v1155, 0.0
  %v1161 = vpack.c.bf16 %v1159, %v1159
  %v1162 = vpack.c.bf16 %v1160, %v1160
  %v1163 = vld [vmem:[%s3] sm:$0xf]
  %v1164 = vld [vmem:[%s3 + $0x4] sm:$0xf]
  %v1165 = vld [vmem:[%s3 + $0x8] sm:$0xf]
  %v1166 = vld [vmem:[%s3 + $0xc] sm:$0xf]
  %v1167 = vld [vmem:[%s3 + $0x10] sm:$0xf]
  %v1168 = vld [vmem:[%s3 + $0x14] sm:$0xf]
  %v1169 = vld [vmem:[%s3 + $0x18] sm:$0xf]
  %v1170 = vld [vmem:[%s3 + $0x1c] sm:$0xf]
  %v1171 = vld [vmem:[%s3 + $0x20] sm:$0xf]
  %v1172 = vld [vmem:[%s3 + $0x24] sm:$0xf]
  %v1173 = vld [vmem:[%s3 + $0x28] sm:$0xf]
  %v1174 = vld [vmem:[%s3 + $0x2c] sm:$0xf]
  %v1175 = vld [vmem:[%s3 + $0x30] sm:$0xf]
  %v1176 = vld [vmem:[%s3 + $0x34] sm:$0xf]
  %v1177 = vld [vmem:[%s3 + $0x38] sm:$0xf]
  %v1178 = vld [vmem:[%s3 + $0x3c] sm:$0xf]
  %v1179 = vld [vmem:[%s3 + $0x40] sm:$0xf]
  %v1180 = vld [vmem:[%s3 + $0x44] sm:$0xf]
  %v1181 = vld [vmem:[%s3 + $0x48] sm:$0xf]
  %v1182 = vld [vmem:[%s3 + $0x4c] sm:$0xf]
  %v1183 = vld [vmem:[%s3 + $0x50] sm:$0x7]
  %v1184 = vld [vmem:[%s4] sm:$0x1]
  %v1186 = vlaneseq
  %v1187 = vshrl.u32 %v1186, 7
  %v1188 = vsub.s32 0, %v1187
  %v1189 = vrot.slane %v1184, %v1188
  %v1212 = vunpack.c.l.b16 %v1163
  %v1213 = vunpack.c.l.b16 %v1164
  %v1214 = vunpack.c.l.b16 %v1165
  %v1215 = vunpack.c.l.b16 %v1166
  %v1216 = vunpack.c.l.b16 %v1167
  %v1217 = vunpack.c.l.b16 %v1168
  %v1218 = vunpack.c.l.b16 %v1169
  %v1219 = vunpack.c.l.b16 %v1170
  %v1220 = vunpack.c.l.b16 %v1171
  %v1221 = vunpack.c.l.b16 %v1172
  %v1222 = vunpack.c.l.b16 %v1173
  %v1223 = vunpack.c.l.b16 %v1174
  %v1224 = vunpack.c.l.b16 %v1175
  %v1225 = vunpack.c.l.b16 %v1176
  %v1226 = vunpack.c.l.b16 %v1177
  %v1227 = vunpack.c.l.b16 %v1178
  %v1228 = vunpack.c.l.b16 %v1179
  %v1229 = vunpack.c.l.b16 %v1180
  %v1230 = vunpack.c.l.b16 %v1181
  %v1231 = vunpack.c.l.b16 %v1182
  %v1232 = vunpack.c.l.b16 %v1183
  %v1233 = vpack.c.b16 %v1213, %v1212
  %v1234 = vpack.c.b16 %v1215, %v1214
  %v1235 = vpack.c.b16 %v1217, %v1216
  %v1236 = vpack.c.b16 %v1219, %v1218
  %v1237 = vpack.c.b16 %v1221, %v1220
  %v1238 = vpack.c.b16 %v1223, %v1222
  %v1239 = vpack.c.b16 %v1225, %v1224
  %v1240 = vpack.c.b16 %v1227, %v1226
  %v1241 = vpack.c.b16 %v1229, %v1228
  %v1242 = vpack.c.b16 %v1231, %v1230
  %v1243 = vpack.c.b16 %v1232, %v1232
  %vm1254 = vcmask 302080
  %v1256 = vsel %vm1254, %v1162, 0
  %vm1258 = vcmask 1041408
  %vm1259 = vcmask 1042432
  %v1260 = vsel %vm1258, 4294967295, 65535
  %v1261 = vsel %vm1259, %v1260, 0
  %v1263 = vand.u32 %v1243, %v1261
  %1265 = vmatprep.subr.bf16.mxu0 0
  %1266 = vmatpush1.bf16.msra.mxu0 %v1233
  %1267 = vmatprep.subr.bf16.mxu0 0
  %1268 = vmatpush1.bf16.msra.mxu0 %v1234
  %1269 = vmatprep.subr.bf16.mxu0 0
  %1270 = vmatpush1.bf16.msra.mxu0 %v1235
  %1271 = vmatprep.subr.bf16.mxu0 0
  %1272 = vmatpush1.bf16.msra.mxu0 %v1236
  %1273 = vmatprep.subr.bf16.mxu0 0
  %1274 = vmatpush1.bf16.msra.mxu0 %v1237
  %1275 = vmatprep.subr.bf16.mxu0 0
  %1276 = vmatpush1.bf16.msra.mxu0 %v1238
  %1277 = vmatprep.subr.bf16.mxu0 0
  %1278 = vmatpush1.bf16.msra.mxu0 %v1239
  %1279 = vmatprep.subr.bf16.mxu0 0
  %1280 = vmatpush1.bf16.msra.mxu0 %v1240
  %1281 = vmatprep.subr.bf16.mxu0 0
  %1282 = vmatpush1.bf16.msra.mxu0 %v1241
  %1283 = vmatprep.subr.bf16.mxu0 0
  %1284 = vmatpush1.bf16.msra.mxu0 %v1242
  %1285 = vmatprep.subr.bf16.mxu0 0
  %1286 = vmatpush1.bf16.msra.mxu0 %v1263
  %1287 = vmatprep.subr.bf16.mxu0 0
  %1288 = vmatpush1.bf16.msra.mxu0 0
  %1289 = vmatprep.subr.bf16.mxu0 0
  %1290 = vmatpush1.bf16.msra.mxu0 0
  %1291 = vmatprep.subr.bf16.mxu0 0
  %1292 = vmatpush1.bf16.msra.mxu0 0
  %1293 = vmatprep.subr.bf16.mxu0 0
  %1294 = vmatpush1.bf16.msra.mxu0 0
  %1295 = vmatprep.subr.bf16.mxu0 0
  %1296 = vmatpush1.bf16.msra.mxu0 0
  %1297 = vmatprep.mubr.bf16.mxu0 %v1256
  %1298 = vmatmul.mubr.bf16.gmra.mrb[0].mxu0 %v1161
  %v1299 = vpop.f32.mrb[0].mxu0
  %v1300 = vadd.f32 %v1189, %v1299
  %v1301 = vpop.f32.mrb[0].mxu0
  %v1302 = vpop.f32.mrb[0].mxu0
  %v1303 = vpop.f32.mrb[0].mxu0
  %1304 = vdwg.mxu0
  %v1305 = vmax.f32 %v1300, 0.0
  %v1306 = vpack.c.bf16 %v1305, %v1305
  %v1307 = vld [vmem:[%s5] sm:$0xf]
  %v1308 = vld [vmem:[%s5 + $0x4] sm:$0xf]
  %v1309 = vld [vmem:[%s5 + $0x8] sm:$0xf]
  %v1310 = vld [vmem:[%s5 + $0xc] sm:$0xf]
  %v1311 = vld [vmem:[%s5 + $0x10] sm:$0xf]
  %v1312 = vld [vmem:[%s5 + $0x14] sm:$0xf]
  %v1313 = vld [vmem:[%s5 + $0x18] sm:$0xf]
  %v1314 = vld [vmem:[%s5 + $0x1c] sm:$0xf]
  %v1315 = vld [vmem:[%s5 + $0x20] sm:$0x3]
  %v1316 = vld [vmem:[%s6] sm:$0x1]
  %v1318 = vlaneseq
  %v1319 = vshrl.u32 %v1318, 7
  %v1320 = vsub.s32 0, %v1319
  %v1321 = vrot.slane %v1316, %v1320
  %v1332 = vunpack.c.l.b16 %v1307
  %v1333 = vunpack.c.l.b16 %v1308
  %v1334 = vunpack.c.l.b16 %v1309
  %v1335 = vunpack.c.l.b16 %v1310
  %v1336 = vunpack.c.l.b16 %v1311
  %v1337 = vunpack.c.l.b16 %v1312
  %v1338 = vunpack.c.l.b16 %v1313
  %v1339 = vunpack.c.l.b16 %v1314
  %v1340 = vunpack.c.l.b16 %v1315
  %v1341 = vpack.c.b16 %v1333, %v1332
  %v1342 = vpack.c.b16 %v1335, %v1334
  %v1343 = vpack.c.b16 %v1337, %v1336
  %v1344 = vpack.c.b16 %v1339, %v1338
  %v1345 = vpack.c.b16 %v1340, %v1340
  %vm1350 = vcmask 547840
  %v1352 = vsel %vm1350, %v1306, 0
  %vm1354 = vcmask 1040384
  %v1355 = vsel %vm1354, 4294967295, 65535
  %v1356 = vsel %vm1258, %v1355, 0
  %v1358 = vand.u32 %v1345, %v1356
  %1360 = vmatprep.subr.bf16.mxu0 0
  %1361 = vmatpush1.bf16.msra.mxu0 %v1341
  %1362 = vmatprep.subr.bf16.mxu0 0
  %1363 = vmatpush1.bf16.msra.mxu0 %v1342
  %1364 = vmatprep.subr.bf16.mxu0 0
  %1365 = vmatpush1.bf16.msra.mxu0 %v1343
  %1366 = vmatprep.subr.bf16.mxu0 0
  %1367 = vmatpush1.bf16.msra.mxu0 %v1344
  %1368 = vmatprep.subr.bf16.mxu0 0
  %1369 = vmatpush1.bf16.msra.mxu0 %v1358
  %1370 = vmatprep.subr.bf16.mxu0 0
  %1371 = vmatpush1.bf16.msra.mxu0 0
  %1372 = vmatprep.subr.bf16.mxu0 0
  %1373 = vmatpush1.bf16.msra.mxu0 0
  %1374 = vmatprep.subr.bf16.mxu0 0
  %1375 = vmatpush1.bf16.msra.mxu0 0
  %1376 = vmatprep.subr.bf16.mxu0 0
  %1377 = vmatpush1.bf16.msra.mxu0 0
  %1378 = vmatprep.subr.bf16.mxu0 0
  %1379 = vmatpush1.bf16.msra.mxu0 0
  %1380 = vmatprep.subr.bf16.mxu0 0
  %1381 = vmatpush1.bf16.msra.mxu0 0
  %1382 = vmatprep.subr.bf16.mxu0 0
  %1383 = vmatpush1.bf16.msra.mxu0 0
  %1384 = vmatprep.subr.bf16.mxu0 0
  %1385 = vmatpush1.bf16.msra.mxu0 0
  %1386 = vmatprep.subr.bf16.mxu0 0
  %1387 = vmatpush1.bf16.msra.mxu0 0
  %1388 = vmatprep.subr.bf16.mxu0 0
  %1389 = vmatpush1.bf16.msra.mxu0 0
  %1390 = vmatprep.subr.bf16.mxu0 0
  %1391 = vmatpush1.bf16.msra.mxu0 0
  %1392 = vmatprep.mubr.bf16.mxu0 0
  %1393 = vmatmul.mubr.bf16.gmra.mrb[0].mxu0 %v1352
  %v1394 = vpop.f32.mrb[0].mxu0
  %v1395 = vadd.f32 %v1321, %v1394
  %v1396 = vpop.f32.mrb[0].mxu0
  %v1397 = vpop.f32.mrb[0].mxu0
  %v1398 = vpop.f32.mrb[0].mxu0
  %1399 = vdwg.mxu0
  %v1400 = vmax.f32 %v1395, 0.0
  %v1401 = vpack.c.bf16 %v1400, %v1400
  %v1402 = vld [vmem:[%s7] sm:$0xf]
  %v1403 = vld [vmem:[%s7 + $0x4] sm:$0xf]
  %v1404 = vld [vmem:[%s7 + $0x8] sm:$0xf]
  %v1405 = vld [vmem:[%s7 + $0xc] sm:$0xf]
  %v1406 = vld [vmem:[%s7 + $0x10] sm:$0xf]
  %v1407 = vld [vmem:[%s7 + $0x14] sm:$0x7]
  %v1408 = vld [vmem:[%s8] sm:$0x1]
  %v1410 = vlaneseq
  %v1411 = vshrl.u32 %v1410, 7
  %v1412 = vsub.s32 0, %v1411
  %v1413 = vrot.slane %v1408, %v1412
  %v1421 = vunpack.c.l.b16 %v1402
  %v1422 = vunpack.c.l.b16 %v1403
  %v1423 = vunpack.c.l.b16 %v1404
  %v1424 = vunpack.c.l.b16 %v1405
  %v1425 = vunpack.c.l.b16 %v1406
  %v1426 = vunpack.c.l.b16 %v1407
  %v1427 = vpack.c.b16 %v1422, %v1421
  %v1428 = vpack.c.b16 %v1424, %v1423
  %v1429 = vpack.c.b16 %v1426, %v1425
  %vm1432 = vcmask 375808
  %v1434 = vsel %vm1432, %v1401, 0
  %vm1436 = vcmask 1046528
  %v1438 = vsel %vm1436, %v1429, 0
  %1440 = vmatprep.subr.bf16.mxu0 0
  %1441 = vmatpush1.bf16.msra.mxu0 %v1427
  %1442 = vmatprep.subr.bf16.mxu0 0
  %1443 = vmatpush1.bf16.msra.mxu0 %v1428
  %1444 = vmatprep.subr.bf16.mxu0 0
  %1445 = vmatpush1.bf16.msra.mxu0 %v1438
  %1446 = vmatprep.subr.bf16.mxu0 0
  %1447 = vmatpush1.bf16.msra.mxu0 0
  %1448 = vmatprep.subr.bf16.mxu0 0
  %1449 = vmatpush1.bf16.msra.mxu0 0
  %1450 = vmatprep.subr.bf16.mxu0 0
  %1451 = vmatpush1.bf16.msra.mxu0 0
  %1452 = vmatprep.subr.bf16.mxu0 0
  %1453 = vmatpush1.bf16.msra.mxu0 0
  %1454 = vmatprep.subr.bf16.mxu0 0
  %1455 = vmatpush1.bf16.msra.mxu0 0
  %1456 = vmatprep.subr.bf16.mxu0 0
  %1457 = vmatpush1.bf16.msra.mxu0 0
  %1458 = vmatprep.subr.bf16.mxu0 0
  %1459 = vmatpush1.bf16.msra.mxu0 0
  %1460 = vmatprep.subr.bf16.mxu0 0
  %1461 = vmatpush1.bf16.msra.mxu0 0
  %1462 = vmatprep.subr.bf16.mxu0 0
  %1463 = vmatpush1.bf16.msra.mxu0 0
  %1464 = vmatprep.subr.bf16.mxu0 0
  %1465 = vmatpush1.bf16.msra.mxu0 0
  %1466 = vmatprep.subr.bf16.mxu0 0
  %1467 = vmatpush1.bf16.msra.mxu0 0
  %1468 = vmatprep.subr.bf16.mxu0 0
  %1469 = vmatpush1.bf16.msra.mxu0 0
  %1470 = vmatprep.subr.bf16.mxu0 0
  %1471 = vmatpush1.bf16.msra.mxu0 0
  %1472 = vmatprep.mubr.bf16.mxu0 0
  %1473 = vmatmul.mubr.bf16.gmra.mrb[0].mxu0 %v1434
  %v1474 = vpop.f32.mrb[0].mxu0
  %v1475 = vadd.f32 %v1413, %v1474
  %v1476 = vpop.f32.mrb[0].mxu0
  %v1477 = vpop.f32.mrb[0].mxu0
  %v1478 = vpop.f32.mrb[0].mxu0
  %1479 = vdwg.mxu0
  %v1480 = vmax.f32 %v1475, 0.0
  %v1481 = vld [vmem:[%s9] sm:$0x1]
  %v1482 = vunpack.c.l.bf16 %v1481
  %v1483 = vlaneseq
  %v1484 = vshrl.u32 %v1483, 7
  %v1485 = vsub.s32 0, %v1484
  %v1486 = vrot.slane %v1482, %v1485
  %v1487 = vmul.f32 %v1480, %v1486
  %vm1488 = vcmask 433152
  %v1489 = vsel %vm1488, %v1487, 0.0
  %1490 = vadd.xlane.f32.xlu0 %v1489
  %v1491 = vpop.xlane.xlu0 %1490
  %v1492 = vld [vmem:[#allocation2] sm:$0x1]
  %v1494 = vlaneseq
  %v1495 = vshrl.u32 %v1494, 7
  %v1496 = vsub.s32 0, %v1495
  %v1497 = vrot.slane %v1492, %v1496
  %v1499 = vadd.f32 %v1491, %v1497
  %v1500 = vxor.u32 %v1499, 2147483648
  %v1501 = vmul.f32 %v1500, 1.442695
  %v1502 = vpow.pop %v1501
  %v1503 = vadd.f32 %v1502, 1.0
  %v1504 = vrcp.pop %v1503
  %v1505 = vmul.f32 1.0, %v1504
  %vm1506 = vcmask 7168
  %1507 = vst.msk [vmem:[%s11] sm:$0xff] %vm1506, %v1505
  // Predicated region
  $region46: #{tpu_custom_call.1} parent=0 // pred_check
    _
  $region47: #{tpu_custom_call.1} parent=0 // pred_check_branch
    %1509 = sbr.rel (0) target = $region49
  $region48: #{tpu_custom_call.1} parent=0 // pred_region
    _
  $region49: #{tpu_custom_call.1} parent=0 // pred_fallthru
    _
  // Predicated region
  $region50: #{tpu_custom_call.1} parent=0 // pred_check
    _
  $region51: #{tpu_custom_call.1} parent=0 // pred_check_branch
    %1511 = sbr.rel (0) target = $region53
  $region52: #{tpu_custom_call.1} parent=0 // pred_region
    _
  $region53: #{tpu_custom_call.1} parent=0 // pred_fallthru
    _

</llo_original>
